<compile_context>
chip_gen: v6e
topology: v6e:2x2x1
jax: 0.10.0
libtpu: 0.0.40
codegen_flags: <defaults>
</compile_context>

<pallas_src>
import functools
import math

import jax
import jax.numpy as jnp
from jax import lax
from jax.experimental import pallas as pl
from jax.experimental.pallas import tpu as pltpu


# ----------------------------- device-aware tuning helpers -----------------------------
def _device_kind():
    try:
        return jax.devices()[0].device_kind.lower()
    except Exception:
        return ""


def _mxu_lanes():
    """Target lane width for a head group: 256 on the 256x256-MXU chips."""
    kind = _device_kind()
    if "v6" in kind or "v7" in kind:
        return 256
    return 128


def _vmem_limit():
    kind = _device_kind()
    if "v7" in kind:
        return 48 * 1024 * 1024     # 64 MiB physical VMEM: leave headroom
    if "v5" in kind or "v6" in kind:
        return 64 * 1024 * 1024     # 128 MiB physical VMEM
    return 32 * 1024 * 1024


def _pick_tile_m(m):
    """Row tile for the QKV projection. Returns (TM, padded_M)."""
    kind = _device_kind()
    if "v7" in kind:
        candidates = (256, 128, 64, 32, 16, 8)          # tighter VMEM budget
    else:
        candidates = (1024, 512, 256, 128, 64, 32, 16, 8)
    for tm in candidates:
        if m % tm == 0:
            return tm, m
    # No clean divisor: keep the streaming structure with a zero-padded tail
    # instead of making the whole activation resident.
    tm = 256
    while tm > m:
        tm //= 2
    tm = max(tm, 8)
    return tm, pl.cdiv(m, tm) * tm


def _pick_head_block(num_heads, head_dim):
    """Smallest head group HB (dividing NH) whose width HB*D is lane-dense.
    Prefer the MXU width (256 on v6e/v7x), fall back to 128, else all heads."""
    for width in (_mxu_lanes(), 128):
        for hb in range(1, num_heads + 1):
            if num_heads % hb == 0 and (hb * head_dim) % width == 0:
                return hb
    return num_heads


def _pick_query_tile(s):
    """Query tile TQ: bounds the (TQ, S) softmax live set. Full S for small S."""
    for tq in (512, 256, 128):
        if s % tq == 0:
            return tq
    return s


# ----------------------------- Kernel 1: fused QKV projection -----------------------------
def qkv_kernel(x_ref, w_ref, b_ref, q_ref, k_ref, v_ref, *, hidden):
    # x_ref: (TM, H) bf16; w_ref: (H, 3H) bf16; b_ref: (1, 3H) f32.
    # Three separate dots against static lane slices of the fused weight so the
    # peak live f32 intermediate is (TM, H), not (TM, 3H); each result is cast
    # and stored immediately (interleaves MXU -> cast -> store).
    x = x_ref[...]
    for idx, out_ref in enumerate((q_ref, k_ref, v_ref)):
        lo = idx * hidden
        hi = lo + hidden
        acc = jnp.dot(x, w_ref[:, lo:hi], preferred_element_type=jnp.float32)
        acc = acc + b_ref[:, lo:hi]
        out_ref[...] = acc.astype(out_ref.dtype)


def qkv_projection(x2d, w_fused, b_fused, hidden):
    # x2d: (M, H) bf16; w_fused: (H, 3H) bf16; b_fused: (1, 3H) f32
    M, H = x2d.shape
    H3 = w_fused.shape[1]
    TM, M_pad = _pick_tile_m(M)
    if M_pad != M:
        x2d = jnp.pad(x2d, ((0, M_pad - M), (0, 0)))
    grid = (M_pad // TM,)
    kernel = functools.partial(qkv_kernel, hidden=hidden)
    out_shape = tuple(jax.ShapeDtypeStruct((M_pad, hidden), jnp.bfloat16)
                      for _ in range(3))
    q2d, k2d, v2d = pl.pallas_call(
        kernel,
        out_shape=out_shape,
        grid_spec=pltpu.PrefetchScalarGridSpec(
            num_scalar_prefetch=0,
            grid=grid,
            in_specs=[
                pl.BlockSpec((TM, H), lambda i: (i, 0)),   # x tile (streamed)
                pl.BlockSpec((H, H3), lambda i: (0, 0)),   # fused weight (resident)
                pl.BlockSpec((1, H3), lambda i: (0, 0)),   # fused bias   (resident)
            ],
            out_specs=(
                pl.BlockSpec((TM, hidden), lambda i: (i, 0)),
                pl.BlockSpec((TM, hidden), lambda i: (i, 0)),
                pl.BlockSpec((TM, hidden), lambda i: (i, 0)),
            ),
        ),
        compiler_params=pltpu.CompilerParams(
            dimension_semantics=("parallel",),
            vmem_limit_bytes=_vmem_limit()),
    )(x2d, w_fused, b_fused)
    if M_pad != M:
        q2d, k2d, v2d = q2d[:M], k2d[:M], v2d[:M]
    return q2d, k2d, v2d


# ----------------------------- Kernel 2: attention -----------------------------
def attn_kernel(q_ref, k_ref, v_ref, mask_ref, ctx_ref, *maybe_probs,
                heads_per_block, head_dim):
    # q_ref:   (1, TQ, HB*D) bf16 (1/sqrt(D) already folded into Wq/bq)
    # k/v_ref: (1, S,  HB*D) bf16
    # mask_ref:(1, 1, 1, S)  f32 additive mask over key positions
    # ctx_ref: (1, TQ, HB*D) bf16; probs_ref (optional): (1, HB, TQ, S) bf16
    probs_ref = maybe_probs[0] if maybe_probs else None

    mask_b = mask_ref[0, 0]          # (1, S) f32 — hoisted out of the head loop
    q = q_ref[0]                     # (TQ, HB*D) bf16
    k = k_ref[0]                     # (S,  HB*D) bf16
    v = v_ref[0]

    ctx_parts = []
    for h in range(heads_per_block):  # small, unrolled
        lo = h * head_dim
        hi = lo + head_dim

        # scores = q_h @ k_h^T without materializing a transposed copy.
        scores = lax.dot_general(
            q[:, lo:hi], k[:, lo:hi],
            dimension_numbers=(((1,), (1,)), ((), ())),
            preferred_element_type=jnp.float32)          # (TQ, S) f32
        scores = scores + mask_b

        # numerically-stable softmax over keys (f32)
        # TODO(synk): on v6e/v7x a bf16 exp (f32 accumulation of the denom)
        #             would roughly double EUP throughput if tolerance allows.
        m = jnp.max(scores, axis=-1, keepdims=True)
        e = jnp.exp(scores - m)
        denom = jnp.sum(e, axis=-1, keepdims=True)
        probs = e * pl.reciprocal(denom, approx=True)

        if probs_ref is not None:
            probs_ref[0, h] = probs.astype(probs_ref.dtype)

        # TODO(synk): attention-probs dropout / head_mask would apply here.
        ctx_parts.append(jnp.dot(probs.astype(v.dtype), v[:, lo:hi],
                                 preferred_element_type=jnp.float32))

    # One lane-dense full-width store per grid step (no masked 64-lane vst).
    ctx_ref[0] = jnp.concatenate(ctx_parts, axis=-1).astype(ctx_ref.dtype)


def attention(q3, k3, v3, attn_mask, num_heads, *, output_attentions):
    # q3/k3/v3: (B, S, H) bf16; attn_mask: (B, 1, 1, S) f32 additive.
    B, S, H = q3.shape
    D = H // num_heads
    HB = _pick_head_block(num_heads, D)       # heads per grid step
    G = num_heads // HB
    TQ = _pick_query_tile(S)                  # query rows per grid step
    QT = S // TQ

    kernel = functools.partial(attn_kernel, heads_per_block=HB, head_dim=D)
    q_spec = pl.BlockSpec((1, TQ, HB * D), lambda b, g, t: (b, t, g))
    kv_spec = pl.BlockSpec((1, S, HB * D), lambda b, g, t: (b, 0, g))  # const in t -> no re-DMA
    mask_spec = pl.BlockSpec((1, 1, 1, S), lambda b, g, t: (b, 0, 0, 0))
    ctx_spec = pl.BlockSpec((1, TQ, HB * D), lambda b, g, t: (b, t, g))

    ctx_shape = jax.ShapeDtypeStruct((B, S, H), jnp.bfloat16)
    if output_attentions:
        probs_spec = pl.BlockSpec((1, HB, TQ, S), lambda b, g, t: (b, g, t, 0))
        out_shape = (ctx_shape,
                     jax.ShapeDtypeStruct((B, num_heads, S, S), jnp.bfloat16))
        out_specs = (ctx_spec, probs_spec)
    else:
        out_shape = ctx_shape
        out_specs = ctx_spec

    result = pl.pallas_call(
        kernel,
        out_shape=out_shape,
        grid_spec=pltpu.PrefetchScalarGridSpec(
            num_scalar_prefetch=0,
            grid=(B, G, QT),
            in_specs=[q_spec, kv_spec, kv_spec, mask_spec],
            out_specs=out_specs,
        ),
        compiler_params=pltpu.CompilerParams(
            dimension_semantics=("parallel", "parallel", "parallel"),
            vmem_limit_bytes=_vmem_limit()),
    )(q3, k3, v3, attn_mask)
    # TODO(synk): for S >= 2048 switch to a flash-style KV-tiled grid axis
    # ("arbitrary") with online softmax (probs output dropped anyway then).
    if output_attentions:
        return result
    return result, None


# ----------------------------- Wrapper (glue in plain JAX) -----------------------------
def bert_self_attention(hidden_states, params, attention_mask, num_heads,
                        *, output_attentions=True):
    """hidden_states: (B, S, H) f32. attention_mask: (B, 1, 1, S) additive f32 or None.
    Returns (context_layer (B, S, H) bf16, attention_probs (B, NH, S, S) bf16 or None)."""
    B, S, H = hidden_states.shape
    assert H % num_heads == 0
    D = H // num_heads
    scale = 1.0 / math.sqrt(D)

    if attention_mask is None:
        attention_mask = jnp.zeros((B, 1, 1, S), dtype=jnp.float32)

    # Fold the 1/sqrt(D) score scale into the query projection (f32, one-time),
    # fuse Q/K/V weights into a single (H, 3H) matrix, cast MXU operands to bf16.
    wq_t = (params["wq"] * scale).T
    wk_t = params["wk"].T
    wv_t = params["wv"].T
    w_fused = jnp.concatenate([wq_t, wk_t, wv_t], axis=1).astype(jnp.bfloat16)
    b_fused = jnp.concatenate(
        [params["bq"] * scale, params["bk"], params["bv"]]).astype(jnp.float32)[None, :]

    x2d = hidden_states.reshape(B * S, H).astype(jnp.bfloat16)
    q2d, k2d, v2d = qkv_projection(x2d, w_fused, b_fused, H)

    # (B*S, H) -> (B, S, H): leading-dim reshape only (free); the head split is
    # done inside the attention BlockSpec index maps (no transposes).
    q3 = q2d.reshape(B, S, H)
    k3 = k2d.reshape(B, S, H)
    v3 = v2d.reshape(B, S, H)

    return attention(q3, k3, v3, attention_mask.astype(jnp.float32), num_heads,
                     output_attentions=output_attentions)


# ----------------------------- Reference (pure JAX, f32) -----------------------------
def reference(hidden_states, params, attention_mask, num_heads):
    B, S, H = hidden_states.shape
    D = H // num_heads
    q = hidden_states @ params["wq"].T + params["bq"]
    k = hidden_states @ params["wk"].T + params["bk"]
    v = hidden_states @ params["wv"].T + params["bv"]
    to_h = lambda y: y.reshape(B, S, num_heads, D).transpose(0, 2, 1, 3)
    q, k, v = to_h(q), to_h(k), to_h(v)
    scores = jnp.einsum("bhqd,bhkd->bhqk", q, k) / math.sqrt(D)
    scores = scores + attention_mask
    probs = jax.nn.softmax(scores, axis=-1)
    ctx = jnp.einsum("bhqk,bhkd->bhqd", probs, v)
    return ctx.transpose(0, 2, 1, 3).reshape(B, S, H), probs


if __name__ == "__main__":
    # Small BERT-like config
    B, S, H, NH = 2, 8, 32, 4

    key = jax.random.PRNGKey(0)
    k_x, k_wq, k_bq, k_wk, k_bk, k_wv, k_bv, k_m = jax.random.split(key, 8)

    hidden_states = jax.random.normal(k_x, (B, S, H), dtype=jnp.float32)
    params = {
        # nn.Linear weight layout: (out_features, in_features)
        "wq": jax.random.normal(k_wq, (H, H), dtype=jnp.float32) * 0.05,
        "bq": jax.random.normal(k_bq, (H,), dtype=jnp.float32) * 0.05,
        "wk": jax.random.normal(k_wk, (H, H), dtype=jnp.float32) * 0.05,
        "bk": jax.random.normal(k_bk, (H,), dtype=jnp.float32) * 0.05,
        "wv": jax.random.normal(k_wv, (H, H), dtype=jnp.float32) * 0.05,
        "bv": jax.random.normal(k_bv, (H,), dtype=jnp.float32) * 0.05,
    }
    # Additive attention mask (BERT style, broadcast shape (B, 1, 1, S)):
    # 0 for keep, -10000 for masked positions. Mask out last key position of batch 1.
    mask_keep = jnp.ones((B, S), dtype=jnp.float32).at[1, -1].set(0.0)
    attention_mask = ((1.0 - mask_keep) * -10000.0)[:, None, None, :]

    # Path 1: with attention_probs (output_attentions=True)
    ctx, probs = bert_self_attention(hidden_states, params, attention_mask, NH,
                                     output_attentions=True)
    jax.block_until_ready((ctx, probs))

    # Path 2: without attention_probs (drops the largest HBM write entirely)
    ctx_np, probs_np = bert_self_attention(hidden_states, params, attention_mask, NH,
                                           output_attentions=False)
    jax.block_until_ready(ctx_np)
    assert probs_np is None

    ctx_ref, probs_ref = reference(hidden_states, params, attention_mask, NH)

    assert ctx.shape == (B, S, H)
    assert probs.shape == (B, NH, S, S)
    # bf16 MXU operands + bf16 context/probs outputs -> relaxed (but tight) tolerances.
    assert jnp.allclose(ctx.astype(jnp.float32), ctx_ref, atol=3e-2, rtol=3e-2)
    assert jnp.allclose(probs.astype(jnp.float32), probs_ref, atol=3e-2, rtol=3e-2)
    assert jnp.allclose(ctx_np.astype(jnp.float32), ctx.astype(jnp.float32),
                        atol=1e-6, rtol=1e-6)

    print("KERNEL_OK")
</pallas_src>

<mosaic_0001>
module attributes {stable_mosaic.version = 11 : i64} {
  func.func @qkv_kernel(%arg0: i32, %arg1: memref<16x32xbf16, #tpu.memory_space<vmem>>, %arg2: memref<32x96xbf16, #tpu.memory_space<vmem>>, %arg3: memref<1x96xf32, #tpu.memory_space<vmem>>, %arg4: memref<16x32xbf16, #tpu.memory_space<vmem>>, %arg5: memref<16x32xbf16, #tpu.memory_space<vmem>>, %arg6: memref<16x32xbf16, #tpu.memory_space<vmem>>) attributes {dimension_semantics = [#tpu.dimension_semantics<parallel>], iteration_bounds = array<i64: 1>, scalar_prefetch = 0 : i64, scratch_operands = 0 : i64, tpu.core_type = #tpu.core_type<tc>, window_params = [{transform_indices = @transform_0, window_bounds = array<i64: 16, 32>}, {pipeline_mode = #tpu.pipeline_mode<synchronous>, transform_indices = @transform_1, window_bounds = array<i64: 32, 96>}, {pipeline_mode = #tpu.pipeline_mode<synchronous>, transform_indices = @transform_2, window_bounds = array<i64: 1, 96>}, {transform_indices = @transform_3, window_bounds = array<i64: 16, 32>}, {transform_indices = @transform_4, window_bounds = array<i64: 16, 32>}, {transform_indices = @transform_5, window_bounds = array<i64: 16, 32>}]} {
    %c0 = arith.constant 0 : index
    %c0_0 = arith.constant 0 : index
    %0 = vector.load %arg1[%c0, %c0_0] : memref<16x32xbf16, #tpu.memory_space<vmem>>, vector<16x32xbf16>
    %c0_1 = arith.constant 0 : index
    %c0_2 = arith.constant 0 : index
    %1 = vector.load %arg2[%c0_1, %c0_2] : memref<32x96xbf16, #tpu.memory_space<vmem>>, vector<32x32xbf16>
    %cst = arith.constant dense<0.000000e+00> : vector<16x32xf32>
    %2 = tpu.matmul %0, %1, %cst {dimension_numbers = #tpu.dot_dimension_numbers<[1], [0], [0], [1], [0, 0, 1, 1], [], []>} : vector<16x32xbf16>, vector<32x32xbf16>, vector<16x32xf32> -> vector<16x32xf32>
    %c0_3 = arith.constant 0 : index
    %c0_4 = arith.constant 0 : index
    %3 = vector.load %arg3[%c0_3, %c0_4] : memref<1x96xf32, #tpu.memory_space<vmem>>, vector<1x32xf32>
    %4 = vector.broadcast %3 : vector<1x32xf32> to vector<16x32xf32>
    %5 = arith.addf %2, %4 : vector<16x32xf32>
    %6 = arith.truncf %5 : vector<16x32xf32> to vector<16x32xbf16>
    %c0_5 = arith.constant 0 : index
    %c0_6 = arith.constant 0 : index
    %7 = vector.load %arg4[%c0_5, %c0_6] : memref<16x32xbf16, #tpu.memory_space<vmem>>, vector<16x32xbf16>
    tpu.vector_store %arg4[%c0_5, %c0_6], %6 {strides = array<i32>} : memref<16x32xbf16, #tpu.memory_space<vmem>>, vector<16x32xbf16>,
    %c0_7 = arith.constant 0 : index
    %c32 = arith.constant 32 : index
    %8 = vector.load %arg2[%c0_7, %c32] : memref<32x96xbf16, #tpu.memory_space<vmem>>, vector<32x32xbf16>
    %cst_8 = arith.constant dense<0.000000e+00> : vector<16x32xf32>
    %9 = tpu.matmul %0, %8, %cst_8 {dimension_numbers = #tpu.dot_dimension_numbers<[1], [0], [0], [1], [0, 0, 1, 1], [], []>} : vector<16x32xbf16>, vector<32x32xbf16>, vector<16x32xf32> -> vector<16x32xf32>
    %c0_9 = arith.constant 0 : index
    %c32_10 = arith.constant 32 : index
    %10 = vector.load %arg3[%c0_9, %c32_10] : memref<1x96xf32, #tpu.memory_space<vmem>>, vector<1x32xf32>
    %11 = vector.broadcast %10 : vector<1x32xf32> to vector<16x32xf32>
    %12 = arith.addf %9, %11 : vector<16x32xf32>
    %13 = arith.truncf %12 : vector<16x32xf32> to vector<16x32xbf16>
    %c0_11 = arith.constant 0 : index
    %c0_12 = arith.constant 0 : index
    %14 = vector.load %arg5[%c0_11, %c0_12] : memref<16x32xbf16, #tpu.memory_space<vmem>>, vector<16x32xbf16>
    tpu.vector_store %arg5[%c0_11, %c0_12], %13 {strides = array<i32>} : memref<16x32xbf16, #tpu.memory_space<vmem>>, vector<16x32xbf16>,
    %c0_13 = arith.constant 0 : index
    %c64 = arith.constant 64 : index
    %15 = vector.load %arg2[%c0_13, %c64] : memref<32x96xbf16, #tpu.memory_space<vmem>>, vector<32x32xbf16>
    %cst_14 = arith.constant dense<0.000000e+00> : vector<16x32xf32>
    %16 = tpu.matmul %0, %15, %cst_14 {dimension_numbers = #tpu.dot_dimension_numbers<[1], [0], [0], [1], [0, 0, 1, 1], [], []>} : vector<16x32xbf16>, vector<32x32xbf16>, vector<16x32xf32> -> vector<16x32xf32>
    %c0_15 = arith.constant 0 : index
    %c64_16 = arith.constant 64 : index
    %17 = vector.load %arg3[%c0_15, %c64_16] : memref<1x96xf32, #tpu.memory_space<vmem>>, vector<1x32xf32>
    %18 = vector.broadcast %17 : vector<1x32xf32> to vector<16x32xf32>
    %19 = arith.addf %16, %18 : vector<16x32xf32>
    %20 = arith.truncf %19 : vector<16x32xf32> to vector<16x32xbf16>
    %c0_17 = arith.constant 0 : index
    %c0_18 = arith.constant 0 : index
    %21 = vector.load %arg6[%c0_17, %c0_18] : memref<16x32xbf16, #tpu.memory_space<vmem>>, vector<16x32xbf16>
    tpu.vector_store %arg6[%c0_17, %c0_18], %20 {strides = array<i32>} : memref<16x32xbf16, #tpu.memory_space<vmem>>, vector<16x32xbf16>,
    return
  }
  func.func @transform_0(%arg0: i32) -> (i32, i32) {
    %c0_i32 = arith.constant 0 : i32
    %c0_i32_0 = arith.constant 0 : i32
    return %arg0, %c0_i32 : i32, i32
  }
  func.func @transform_1(%arg0: i32) -> (i32, i32) {
    %c0_i32 = arith.constant 0 : i32
    %c0_i32_0 = arith.constant 0 : i32
    %c0_i32_1 = arith.constant 0 : i32
    return %c0_i32, %c0_i32_0 : i32, i32
  }
  func.func @transform_2(%arg0: i32) -> (i32, i32) {
    %c0_i32 = arith.constant 0 : i32
    %c0_i32_0 = arith.constant 0 : i32
    %c0_i32_1 = arith.constant 0 : i32
    return %c0_i32, %c0_i32_0 : i32, i32
  }
  func.func @transform_3(%arg0: i32) -> (i32, i32) {
    %c0_i32 = arith.constant 0 : i32
    %c0_i32_0 = arith.constant 0 : i32
    return %arg0, %c0_i32 : i32, i32
  }
  func.func @transform_4(%arg0: i32) -> (i32, i32) {
    %c0_i32 = arith.constant 0 : i32
    %c0_i32_0 = arith.constant 0 : i32
    return %arg0, %c0_i32 : i32, i32
  }
  func.func @transform_5(%arg0: i32) -> (i32, i32) {
    %c0_i32 = arith.constant 0 : i32
    %c0_i32_0 = arith.constant 0 : i32
    return %arg0, %c0_i32 : i32, i32
  }
}

</mosaic_0001>

<llo_original>
// kernel: tpu_custom_call.1
$region0: #{tpu_custom_call.1}
  #allocation0 [shape = 'u32[]', space=smem, size = 0x4, offset = 0x4, fixed_abs, tag = 'smem constant byte address 0x4 - core index']
  #allocation1 [shape = 'u32[144,128]{1,0:T(1,128)}', space=vmem, size = 0x12000, scoped, tag = 'internal scratch']
  %s0 = inlined_call_operand.hbm [shape: bf16[16,32], index: 0, kind: input, shape index: {}]
  %s1 = inlined_call_operand.hbm [shape: bf16[32,96], index: 1, kind: input, shape index: {}]
  %s2 = inlined_call_operand.vmem [shape: f32[1,96], index: 2, kind: input, shape index: {}]
  %s3 = inlined_call_operand.hbm [shape: bf16[16,32], index: 3, kind: output, shape index: {0}]
  %s4 = inlined_call_operand.hbm [shape: bf16[16,32], index: 4, kind: output, shape index: {1}]
  %s5 = inlined_call_operand.hbm [shape: bf16[16,32], index: 5, kind: output, shape index: {2}]
  %6 = xla_tuple %s3, %s4, %s5
  %s7 = sld [smem:[#allocation0]]
  $region46: #{tpu_custom_call.1} parent=0
    _
  %s9 = ssub.s32 1, %s7
  %s10 = scalar_select 0, %s9, %s7
  $region1: #{tpu_custom_call.1} parent=0
    #allocation2 [shape = 'u8[4096]{0}', space=vmem, size = 0x1000, scoped, tag = 'input window, operand 0, single buffered']
    #allocation3 [shape = 's32[1]{0}', space=sflag, size = 0x4, scoped, tag = 'scoped memory for tpu_custom_call.1']
    #allocation4 [shape = 's32[1]{0}', space=sflag, size = 0x4, scoped, tag = 'scoped memory for tpu_custom_call.1']
    #allocation5 [shape = 'u8[8192]{0}', space=vmem, size = 0x2000, scoped, tag = 'input window, operand 1, single buffered']
    #allocation6 [shape = 's32[1]{0}', space=sflag, size = 0x4, scoped, tag = 'scoped memory for tpu_custom_call.1']
    #allocation7 [shape = 'u8[4096]{0}', space=vmem, size = 0x1000, scoped, tag = 'output window, operand 0, single buffered']
    #allocation8 [shape = 'u8[4096]{0}', space=vmem, size = 0x1000, scoped, tag = 'output window, operand 1, single buffered']
    #allocation9 [shape = 's32[1]{0}', space=sflag, size = 0x4, scoped, tag = 'scoped memory for tpu_custom_call.1']
    #allocation10 [shape = 'u8[4096]{0}', space=vmem, size = 0x1000, scoped, tag = 'output window, operand 2, single buffered']
    %11 = vsyncpa [#allocation3], 0
    %12 = vsyncpa [#allocation6], 0
    %13 = vsyncpa [#allocation4], 0
    %14 = vsyncpa [#allocation9], 0
    // Predicated region
    $region2: #{tpu_custom_call.1} parent=1 // pred_check
      _
    $region3: #{tpu_custom_call.1} parent=1 // pred_check_branch
      %16 = sbr.rel (0) target = $region5
    $region4: #{tpu_custom_call.1} parent=1 // pred_region
      %s18 = ssub.s32 128, 128
      %19 = vsyncadd [#allocation3], %s18
      %s20 = sshll.u32 [#allocation2], 4
      %s21 = int_to_ptr.vmem [resolvable:$true] %s20
      %26 = dma.hbm_to_vmem [thread:$0]  %s0, 128, %s21, [#allocation3], 64, 64, 4
    $region5: #{tpu_custom_call.1} parent=1 // pred_fallthru
      _
    // Predicated region
    $region6: #{tpu_custom_call.1} parent=1 // pred_check
      _
    $region7: #{tpu_custom_call.1} parent=1 // pred_check_branch
      %28 = sbr.rel (0) target = $region9
    $region8: #{tpu_custom_call.1} parent=1 // pred_region
      %s30 = ssub.s32 256, 256
      %31 = vsyncadd [#allocation6], %s30
      %s32 = sshll.u32 [#allocation5], 4
      %s33 = int_to_ptr.vmem [resolvable:$true] %s32
      %38 = dma.hbm_to_vmem [thread:$0]  %s1, 256, %s33, [#allocation6], 64, 64, 4
    $region9: #{tpu_custom_call.1} parent=1 // pred_fallthru
      _
    // Predicated region
    $region10: #{tpu_custom_call.1} parent=1 // pred_check
      _
    $region11: #{tpu_custom_call.1} parent=1 // pred_check_branch
      %40 = sbr.rel (0) target = $region13
    $region12: #{tpu_custom_call.1} parent=1 // pred_region
      _
    $region13: #{tpu_custom_call.1} parent=1 // pred_fallthru
      _
    // Predicated region
    $region14: #{tpu_custom_call.1} parent=1 // pred_check
      _
    $region15: #{tpu_custom_call.1} parent=1 // pred_check_branch
      %42 = sbr.rel (0) target = $region17
    $region16: #{tpu_custom_call.1} parent=1 // pred_region
      %43 = dma.done [#allocation3], 128
    $region17: #{tpu_custom_call.1} parent=1 // pred_fallthru
      _
    // Predicated region
    $region18: #{tpu_custom_call.1} parent=1 // pred_check
      _
    $region19: #{tpu_custom_call.1} parent=1 // pred_check_branch
      %45 = sbr.rel (0) target = $region21
    $region20: #{tpu_custom_call.1} parent=1 // pred_region
      %46 = dma.done [#allocation6], 256
    $region21: #{tpu_custom_call.1} parent=1 // pred_fallthru
      _
    %v48 = vld [vmem:[#allocation2] sm:$0xf]
    %v49 = vld [vmem:[#allocation2 + $0x4] sm:$0xf]
    %v50 = vld [vmem:[#allocation5] sm:$0xf]
    %v51 = vld [vmem:[#allocation5 + $0x4] sm:$0xf]
    %v52 = vld [vmem:[#allocation5 + $0x8] sm:$0xf]
    %v53 = vld [vmem:[#allocation5 + $0xc] sm:$0xf]
    %v54 = vld [vmem:[%s2] sm:$0x1]
    %v56 = vlaneseq
    %v57 = vshrl.u32 %v56, 7
    %v58 = vsub.s32 0, %v57
    %v59 = vrot.slane %v54, %v58
    %v63 = vunpack.c.l.b16 %v48
    %v64 = vunpack.c.l.b16 %v49
    %v65 = vpack.c.b16 %v64, %v63
    %v70 = vunpack.c.l.b16 %v50
    %v71 = vunpack.c.l.b16 %v51
    %v72 = vunpack.c.l.b16 %v52
    %v73 = vunpack.c.l.b16 %v53
    %v74 = vpack.c.b16 %v71, %v70
    %v75 = vpack.c.b16 %v73, %v72
    %vm78 = vcmask 261120
    %v80 = vsel %vm78, %v65, 0
    %82 = vmatprep.subr.bf16.mxu0 0
    %83 = vmatpush1.bf16.msra.mxu0 0
    %84 = vmatprep.subr.bf16.mxu0 0
    %85 = vmatpush1.bf16.msra.mxu0 0
    %86 = vmatprep.subr.bf16.mxu0 0
    %87 = vmatpush1.bf16.msra.mxu0 0
    %88 = vmatprep.subr.bf16.mxu0 0
    %89 = vmatpush1.bf16.msra.mxu0 0
    %90 = vmatprep.subr.bf16.mxu0 0
    %91 = vmatpush1.bf16.msra.mxu0 0
    %92 = vmatprep.subr.bf16.mxu0 0
    %93 = vmatpush1.bf16.msra.mxu0 0
    %94 = vmatprep.subr.bf16.mxu0 0
    %95 = vmatpush1.bf16.msra.mxu0 %v75
    %96 = vmatprep.subr.bf16.mxu0 0
    %97 = vmatpush1.bf16.msra.mxu0 %v74
    %98 = vmatprep.subr.bf16.mxu0 0
    %99 = vmatpush2.bf16.msra.mxu0 0
    %100 = vmatprep.subr.bf16.mxu0 0
    %101 = vmatpush2.bf16.msra.mxu0 0
    %102 = vmatprep.subr.bf16.mxu0 0
    %103 = vmatpush2.bf16.msra.mxu0 0
    %104 = vmatprep.subr.bf16.mxu0 0
    %105 = vmatpush2.bf16.msra.mxu0 0
    %106 = vmatprep.subr.bf16.mxu0 0
    %107 = vmatpush2.bf16.msra.mxu0 0
    %108 = vmatprep.subr.bf16.mxu0 0
    %109 = vmatpush2.bf16.msra.mxu0 0
    %110 = vmatprep.subr.bf16.mxu0 0
    %111 = vmatpush2.bf16.msra.mxu0 0
    %112 = vmatprep.subr.bf16.mxu0 0
    %113 = vmatpush2.bf16.msra.mxu0 0
    %114 = vmatprep.mubr.bf16.mxu0 0
    %115 = vmatmul.mubr.bf16.gmra.mxu0 %v80
    %v116 = vpop.f32.mrf.mxu0
    %v117 = vadd.f32 %v59, %v116
    %v118 = vpop.f32.mrf.mxu0
    %v119 = vpop.f32.mrf.mxu0
    %v120 = vadd.f32 %v59, %v119
    %v121 = vpop.f32.mrf.mxu0
    %122 = vdwg.mxu0
    %v123 = vpack.c.bf16 %v120, %v117
    %v125 = vunpack.c.l.b16 %v123
    %v126 = vunpack.c.h.b16 %v123
    %v127 = vpack.c.b16 %v125, %v125
    %v128 = vpack.c.b16 %v126, %v126
    %vm131 = vcmask 257024
    %132 = vst.msk [vmem:[#allocation7] sm:$0xf] %vm131, %v127
    %133 = vst.msk [vmem:[#allocation7 + $0x4] sm:$0xf] %vm131, %v128
    %v134 = vld [vmem:[#allocation5] sm:$0xf]
    %v135 = vld [vmem:[#allocation5 + $0x4] sm:$0xf]
    %v136 = vld [vmem:[#allocation5 + $0x8] sm:$0xf]
    %v137 = vld [vmem:[#allocation5 + $0xc] sm:$0xf]
    %v138 = vld [vmem:[%s2] sm:$0x1]
    %v140 = vlaneseq
    %v141 = vshrl.u32 %v140, 7
    %v142 = vsub.s32 0, %v141
    %v143 = vrot.slane %v138, %v142
    %v148 = vunpack.c.l.b16 %v134
    %v149 = vunpack.c.l.b16 %v135
    %v150 = vunpack.c.l.b16 %v136
    %v151 = vunpack.c.l.b16 %v137
    %v152 = vpack.c.b16 %v149, %v148
    %v153 = vpack.c.b16 %v151, %v150
    %154 = vrot.lane.b32.xlu0 %v152, 96
    %v155 = vpop.permute.xlu0 %154
    %156 = vrot.lane.b32.xlu0 %v153, 96
    %v157 = vpop.permute.xlu0 %156
    %160 = vrot.lane.b32.xlu0 %v143, 96
    %v161 = vpop.permute.xlu0 %160
    %163 = vmatprep.subr.bf16.mxu0 0
    %164 = vmatpush1.bf16.msra.mxu0 0
    %165 = vmatprep.subr.bf16.mxu0 0
    %166 = vmatpush1.bf16.msra.mxu0 0
    %167 = vmatprep.subr.bf16.mxu0 0
    %168 = vmatpush1.bf16.msra.mxu0 0
    %169 = vmatprep.subr.bf16.mxu0 0
    %170 = vmatpush1.bf16.msra.mxu0 0
    %171 = vmatprep.subr.bf16.mxu0 0
    %172 = vmatpush1.bf16.msra.mxu0 0
    %173 = vmatprep.subr.bf16.mxu0 0
    %174 = vmatpush1.bf16.msra.mxu0 0
    %175 = vmatprep.subr.bf16.mxu0 0
    %176 = vmatpush1.bf16.msra.mxu0 %v157
    %177 = vmatprep.subr.bf16.mxu0 0
    %178 = vmatpush1.bf16.msra.mxu0 %v155
    %179 = vmatprep.subr.bf16.mxu0 0
    %180 = vmatpush2.bf16.msra.mxu0 0
    %181 = vmatprep.subr.bf16.mxu0 0
    %182 = vmatpush2.bf16.msra.mxu0 0
    %183 = vmatprep.subr.bf16.mxu0 0
    %184 = vmatpush2.bf16.msra.mxu0 0
    %185 = vmatprep.subr.bf16.mxu0 0
    %186 = vmatpush2.bf16.msra.mxu0 0
    %187 = vmatprep.subr.bf16.mxu0 0
    %188 = vmatpush2.bf16.msra.mxu0 0
    %189 = vmatprep.subr.bf16.mxu0 0
    %190 = vmatpush2.bf16.msra.mxu0 0
    %191 = vmatprep.subr.bf16.mxu0 0
    %192 = vmatpush2.bf16.msra.mxu0 0
    %193 = vmatprep.subr.bf16.mxu0 0
    %194 = vmatpush2.bf16.msra.mxu0 0
    %195 = vmatprep.mubr.bf16.mxu0 0
    %196 = vmatmul.mubr.bf16.gmra.mxu0 %v80
    %v197 = vpop.f32.mrf.mxu0
    %v198 = vadd.f32 %v161, %v197
    %v199 = vpop.f32.mrf.mxu0
    %v200 = vpop.f32.mrf.mxu0
    %v201 = vadd.f32 %v161, %v200
    %v202 = vpop.f32.mrf.mxu0
    %203 = vdwg.mxu0
    %v204 = vpack.c.bf16 %v201, %v198
    %v206 = vunpack.c.l.b16 %v204
    %v207 = vunpack.c.h.b16 %v204
    %v208 = vpack.c.b16 %v206, %v206
    %v209 = vpack.c.b16 %v207, %v207
    %212 = vst.msk [vmem:[#allocation8] sm:$0xf] %vm131, %v208
    %213 = vst.msk [vmem:[#allocation8 + $0x4] sm:$0xf] %vm131, %v209
    %v214 = vld [vmem:[#allocation5] sm:$0xf]
    %v215 = vld [vmem:[#allocation5 + $0x4] sm:$0xf]
    %v216 = vld [vmem:[#allocation5 + $0x8] sm:$0xf]
    %v217 = vld [vmem:[#allocation5 + $0xc] sm:$0xf]
    %v218 = vld [vmem:[%s2] sm:$0x1]
    %v220 = vlaneseq
    %v221 = vshrl.u32 %v220, 7
    %v222 = vsub.s32 0, %v221
    %v223 = vrot.slane %v218, %v222
    %v228 = vunpack.c.l.b16 %v214
    %v229 = vunpack.c.l.b16 %v215
    %v230 = vunpack.c.l.b16 %v216
    %v231 = vunpack.c.l.b16 %v217
    %v232 = vpack.c.b16 %v229, %v228
    %v233 = vpack.c.b16 %v231, %v230
    %234 = vrot.lane.b32.xlu0 %v232, 64
    %v235 = vpop.permute.xlu0 %234
    %236 = vrot.lane.b32.xlu0 %v233, 64
    %v237 = vpop.permute.xlu0 %236
    %240 = vrot.lane.b32.xlu0 %v223, 64
    %v241 = vpop.permute.xlu0 %240
    %243 = vmatprep.subr.bf16.mxu0 0
    %244 = vmatpush1.bf16.msra.mxu0 0
    %245 = vmatprep.subr.bf16.mxu0 0
    %246 = vmatpush1.bf16.msra.mxu0 0
    %247 = vmatprep.subr.bf16.mxu0 0
    %248 = vmatpush1.bf16.msra.mxu0 0
    %249 = vmatprep.subr.bf16.mxu0 0
    %250 = vmatpush1.bf16.msra.mxu0 0
    %251 = vmatprep.subr.bf16.mxu0 0
    %252 = vmatpush1.bf16.msra.mxu0 0
    %253 = vmatprep.subr.bf16.mxu0 0
    %254 = vmatpush1.bf16.msra.mxu0 0
    %255 = vmatprep.subr.bf16.mxu0 0
    %256 = vmatpush1.bf16.msra.mxu0 %v237
    %257 = vmatprep.subr.bf16.mxu0 0
    %258 = vmatpush1.bf16.msra.mxu0 %v235
    %259 = vmatprep.subr.bf16.mxu0 0
    %260 = vmatpush2.bf16.msra.mxu0 0
    %261 = vmatprep.subr.bf16.mxu0 0
    %262 = vmatpush2.bf16.msra.mxu0 0
    %263 = vmatprep.subr.bf16.mxu0 0
    %264 = vmatpush2.bf16.msra.mxu0 0
    %265 = vmatprep.subr.bf16.mxu0 0
    %266 = vmatpush2.bf16.msra.mxu0 0
    %267 = vmatprep.subr.bf16.mxu0 0
    %268 = vmatpush2.bf16.msra.mxu0 0
    %269 = vmatprep.subr.bf16.mxu0 0
    %270 = vmatpush2.bf16.msra.mxu0 0
    %271 = vmatprep.subr.bf16.mxu0 0
    %272 = vmatpush2.bf16.msra.mxu0 0
    %273 = vmatprep.subr.bf16.mxu0 0
    %274 = vmatpush2.bf16.msra.mxu0 0
    %275 = vmatprep.mubr.bf16.mxu0 0
    %276 = vmatmul.mubr.bf16.gmra.mxu0 %v80
    %v277 = vpop.f32.mrf.mxu0
    %v278 = vadd.f32 %v241, %v277
    %v279 = vpop.f32.mrf.mxu0
    %v280 = vpop.f32.mrf.mxu0
    %v281 = vadd.f32 %v241, %v280
    %v282 = vpop.f32.mrf.mxu0
    %283 = vdwg.mxu0
    %v284 = vpack.c.bf16 %v281, %v278
    %v286 = vunpack.c.l.b16 %v284
    %v287 = vunpack.c.h.b16 %v284
    %v288 = vpack.c.b16 %v286, %v286
    %v289 = vpack.c.b16 %v287, %v287
    %292 = vst.msk [vmem:[#allocation10] sm:$0xf] %vm131, %v288
    %293 = vst.msk [vmem:[#allocation10 + $0x4] sm:$0xf] %vm131, %v289
    // Predicated region
    $region22: #{tpu_custom_call.1} parent=1 // pred_check
      _
    $region23: #{tpu_custom_call.1} parent=1 // pred_check_branch
      %295 = sbr.rel (0) target = $region25
    $region24: #{tpu_custom_call.1} parent=1 // pred_region
      %s297 = ssub.s32 128, 128
      %298 = vsyncadd [#allocation4], %s297
      %s299 = sshll.u32 [#allocation7], 4
      %s300 = int_to_ptr.vmem [resolvable:$true] %s299
      %305 = dma.vmem_to_hbm [thread:$0]  %s300, 128, %s3, [#allocation4], 64, 64, 4
    $region25: #{tpu_custom_call.1} parent=1 // pred_fallthru
      _
    // Predicated region
    $region26: #{tpu_custom_call.1} parent=1 // pred_check
      _
    $region27: #{tpu_custom_call.1} parent=1 // pred_check_branch
      %307 = sbr.rel (0) target = $region29
    $region28: #{tpu_custom_call.1} parent=1 // pred_region
      %s309 = ssub.s32 128, 128
      %310 = vsyncadd [#allocation9], %s309
      %s311 = sshll.u32 [#allocation8], 4
      %s312 = int_to_ptr.vmem [resolvable:$true] %s311
      %317 = dma.vmem_to_hbm [thread:$0]  %s312, 128, %s4, [#allocation9], 64, 64, 4
    $region29: #{tpu_custom_call.1} parent=1 // pred_fallthru
      _
    // Predicated region
    $region30: #{tpu_custom_call.1} parent=1 // pred_check
      _
    $region31: #{tpu_custom_call.1} parent=1 // pred_check_branch
      %319 = sbr.rel (0) target = $region33
    $region32: #{tpu_custom_call.1} parent=1 // pred_region
      %s321 = ssub.s32 128, 128
      %322 = vsyncadd [#allocation9], %s321
      %s323 = sshll.u32 [#allocation10], 4
      %s324 = int_to_ptr.vmem [resolvable:$true] %s323
      %329 = dma.vmem_to_hbm [thread:$0]  %s324, 128, %s5, [#allocation9], 64, 64, 4
    $region33: #{tpu_custom_call.1} parent=1 // pred_fallthru
      _
    // Predicated region
    $region34: #{tpu_custom_call.1} parent=1 // pred_check
      _
    $region35: #{tpu_custom_call.1} parent=1 // pred_check_branch
      %331 = sbr.rel (0) target = $region37
    $region36: #{tpu_custom_call.1} parent=1 // pred_region
      %332 = dma.done [#allocation4], 128
    $region37: #{tpu_custom_call.1} parent=1 // pred_fallthru
      _
    // Predicated region
    $region38: #{tpu_custom_call.1} parent=1 // pred_check
      _
    $region39: #{tpu_custom_call.1} parent=1 // pred_check_branch
      %334 = sbr.rel (0) target = $region41
    $region40: #{tpu_custom_call.1} parent=1 // pred_region
      %335 = dma.done [#allocation9], 128
    $region41: #{tpu_custom_call.1} parent=1 // pred_fallthru
      _
    // Predicated region
    $region42: #{tpu_custom_call.1} parent=1 // pred_check
      _
    $region43: #{tpu_custom_call.1} parent=1 // pred_check_branch
      %337 = sbr.rel (0) target = $region45
    $region44: #{tpu_custom_call.1} parent=1 // pred_region
      %338 = dma.done [#allocation9], 128
    $region45: #{tpu_custom_call.1} parent=1 // pred_fallthru
      _
    %339 = vsyncpa [#allocation3], 1
    %340 = vsyncpa [#allocation6], 1
    %341 = vsyncpa [#allocation4], 1
    %342 = vsyncpa [#allocation9], 1

</llo_original>
